<compile_context>
chip_gen: v7x
topology: tpu7x:2x2x1
jax: 0.10.0
libtpu: 0.0.40
codegen_flags: <defaults>
</compile_context>

<pallas_src>
import math
import functools

import jax
import jax.numpy as jnp
from jax import lax
from jax.experimental import pallas as pl
from jax.experimental.pallas import tpu as pltpu


def _round_up(x, m):
    return ((x + m - 1) // m) * m


def _vmem_limit_bytes():
    # ~3/4 of physical VMEM: 96 MiB on v5e/v6e (128 MiB), 48 MiB on v7x (64 MiB).
    try:
        cap = pltpu.get_tpu_info().vmem_capacity_bytes
        return min(int(cap * 3 // 4), 100 * 1024 * 1024)
    except Exception:
        return 48 * 1024 * 1024


_VMEM_LIMIT = _vmem_limit_bytes()


# ---------------------------------------------------------------------------
# Tiled linear projection kernel:  y = x @ W + b
# ---------------------------------------------------------------------------
def _linear_kernel(x_ref, w_ref, b_ref, o_ref, acc_ref):
    @pl.when(pl.program_id(2) == 0)
    def _():
        acc_ref[...] = jnp.zeros_like(acc_ref)

    # Activation cast happens in-kernel (no extra HBM round trip in the wrapper);
    # weights arrive already in bf16.  fp32 VMEM accumulator, K axis last/arbitrary.
    acc_ref[...] += jnp.dot(
        x_ref[...].astype(jnp.bfloat16), w_ref[...],
        preferred_element_type=jnp.float32,
    )

    @pl.when(pl.program_id(2) == pl.num_programs(2) - 1)
    def _():
        o_ref[...] = (acc_ref[...] + b_ref[...]).astype(o_ref.dtype)


def pallas_linear(x2d, w_bf16, b_f32, out_dtype=jnp.float32,
                  tm_target=512, tn_target=512, tk_target=512):
    """x2d: (M, K) f32/bf16, w_bf16: (K, N) bf16, b_f32: (1, N) f32 -> (M, N)."""
    M, K = x2d.shape
    Kw, N = w_bf16.shape
    assert Kw == K

    tm = min(_round_up(M, 8), tm_target)
    tk = min(_round_up(K, 128), tk_target)
    tn = min(_round_up(N, 128), tn_target)
    Mp, Kp, Np = _round_up(M, tm), _round_up(K, tk), _round_up(N, tn)

    # Pad up to tile multiples (zero rows/cols contribute nothing to the matmul).
    if (Mp, Kp) != (M, K):
        x2d = jnp.pad(x2d, ((0, Mp - M), (0, Kp - K)))
    if (Kp, Np) != (K, N):
        w_bf16 = jnp.pad(w_bf16, ((0, Kp - K), (0, Np - N)))
    if Np != N:
        b_f32 = jnp.pad(b_f32, ((0, 0), (0, Np - N)))

    out = pl.pallas_call(
        _linear_kernel,
        grid=(Mp // tm, Np // tn, Kp // tk),
        in_specs=[
            pl.BlockSpec((tm, tk), lambda i, j, k: (i, k)),
            pl.BlockSpec((tk, tn), lambda i, j, k: (k, j)),
            pl.BlockSpec((1, tn), lambda i, j, k: (0, j)),
        ],
        out_specs=pl.BlockSpec((tm, tn), lambda i, j, k: (i, j)),
        out_shape=jax.ShapeDtypeStruct((Mp, Np), out_dtype),
        scratch_shapes=[pltpu.VMEM((tm, tn), jnp.float32)],
        compiler_params=pltpu.CompilerParams(
            dimension_semantics=("parallel", "parallel", "arbitrary"),
            vmem_limit_bytes=_VMEM_LIMIT,
        ),
    )(x2d, w_bf16, b_f32)

    if (Mp, Np) != (M, N):
        out = out[:M, :N]
    return out


# ---------------------------------------------------------------------------
# Flash-style multi-head attention kernel (all heads per grid step).
# ---------------------------------------------------------------------------
def _flash_mha_kernel(*refs, h, d_k, d_v, scale, has_mask):
    if has_mask:
        q_ref, k_ref, v_ref, mask_ref, o_ref, m_sc, l_sc, acc_sc = refs
    else:
        q_ref, k_ref, v_ref, o_ref, m_sc, l_sc, acc_sc = refs

    kv_i = pl.program_id(2)

    @pl.when(kv_i == 0)
    def _():
        m_sc[...] = jnp.full_like(m_sc, -jnp.inf)
        l_sc[...] = jnp.zeros_like(l_sc)
        acc_sc[...] = jnp.zeros_like(acc_sc)

    # Hoisted, shared by all heads:
    #  * 1/sqrt(d_k) folded into Q (tq*d_k multiplies per head, not tq*tkv)
    #  * mask -> additive f32 bias computed once (no per-head compare+select)
    q_all = q_ref[0] * scale                     # (tq, h*d_k) bf16
    k_all = k_ref[0]                             # (tkv, h*d_k) bf16
    v_all = v_ref[0]                             # (tkv, h*d_v) bf16
    if has_mask:
        neg_bias = jnp.where(mask_ref[0] == 0, -1000000000.0, 0.0
                             ).astype(jnp.float32)   # (1|tq, tkv)

    for hh in range(h):
        q_h = q_all[:, hh * d_k:(hh + 1) * d_k]   # (tq, d_k)
        k_h = k_all[:, hh * d_k:(hh + 1) * d_k]   # (tkv, d_k)
        v_h = v_all[:, hh * d_v:(hh + 1) * d_v]   # (tkv, d_v)

        # NT matmul: K consumed transposed by the MXU, no XLU transpose.
        s = lax.dot_general(
            q_h, k_h,
            dimension_numbers=(((1,), (1,)), ((), ())),
            preferred_element_type=jnp.float32,
        )                                         # (tq, tkv) f32, already scaled
        if has_mask:
            s = s + neg_bias

        m_prev = m_sc[hh]                         # (tq, 1)
        m_new = jnp.maximum(m_prev, jnp.max(s, axis=-1, keepdims=True))
        alpha = jnp.exp(m_prev - m_new)
        p = jnp.exp(s - m_new)                    # (tq, tkv) f32
        l_sc[hh] = alpha * l_sc[hh] + jnp.sum(p, axis=-1, keepdims=True)
        acc_sc[hh] = alpha * acc_sc[hh] + lax.dot_general(
            p.astype(v_h.dtype), v_h,
            dimension_numbers=(((1,), (0,)), ((), ())),
            preferred_element_type=jnp.float32,
        )
        m_sc[hh] = m_new

    @pl.when(kv_i == pl.num_programs(2) - 1)
    def _():
        parts = []
        for hh in range(h):
            inv = pl.reciprocal(l_sc[hh], approx=True)   # EUP slot, ~free
            parts.append(acc_sc[hh] * inv)               # (tq, d_v) f32
        # single lane-dense (tq, h*d_v) store
        o_ref[0] = jnp.concatenate(parts, axis=-1).astype(o_ref.dtype)


def pallas_attention(q, k, v, mask3, *, h, d_k, d_v,
                     tq_target=512, tkv_target=1024):
    """q: (B,Sq,h*d_k), k: (B,Sk,h*d_k), v: (B,Sk,h*d_v) bf16,
    mask3: None, (B,1,Sk) or (B,Sq,Sk) int8.  Returns (B,Sq,h*d_v) bf16."""
    B, Sq, _ = q.shape
    Sk = k.shape[1]

    tq = min(_round_up(Sq, 8), tq_target)
    tkv = min(_round_up(Sk, 128), tkv_target)
    Sqp, Skp = _round_up(Sq, tq), _round_up(Sk, tkv)

    # Pad to tile multiples; padded query rows are sliced off, padded keys masked.
    if Sqp != Sq:
        q = jnp.pad(q, ((0, 0), (0, Sqp - Sq), (0, 0)))
        if mask3 is not None and mask3.shape[1] != 1:
            mask3 = jnp.pad(mask3, ((0, 0), (0, Sqp - Sq), (0, 0)))
    if Skp != Sk:
        k = jnp.pad(k, ((0, 0), (0, Skp - Sk), (0, 0)))
        v = jnp.pad(v, ((0, 0), (0, Skp - Sk), (0, 0)))
        if mask3 is None:
            mask3 = jnp.ones((B, 1, Sk), jnp.int8)
        mask3 = jnp.pad(mask3, ((0, 0), (0, 0), (0, Skp - Sk)))

    has_mask = mask3 is not None
    in_specs = [
        pl.BlockSpec((1, tq, h * d_k), lambda b, qi, ki: (b, qi, 0)),
        pl.BlockSpec((1, tkv, h * d_k), lambda b, qi, ki: (b, ki, 0)),
        pl.BlockSpec((1, tkv, h * d_v), lambda b, qi, ki: (b, ki, 0)),
    ]
    operands = [q, k, v]
    if has_mask:
        mask3 = mask3.astype(jnp.int8)      # 4x less mask DMA than int32
        if mask3.shape[1] == 1:             # 2-D padding mask, broadcast in-kernel
            in_specs.append(pl.BlockSpec((1, 1, tkv), lambda b, qi, ki: (b, 0, ki)))
        else:                               # full (B, Sq, Sk) mask
            in_specs.append(pl.BlockSpec((1, tq, tkv), lambda b, qi, ki: (b, qi, ki)))
        operands.append(mask3)

    kernel = functools.partial(
        _flash_mha_kernel, h=h, d_k=d_k, d_v=d_v,
        scale=1.0 / math.sqrt(d_k), has_mask=has_mask)

    out = pl.pallas_call(
        kernel,
        grid=(B, Sqp // tq, Skp // tkv),
        in_specs=in_specs,
        out_specs=pl.BlockSpec((1, tq, h * d_v), lambda b, qi, ki: (b, qi, 0)),
        out_shape=jax.ShapeDtypeStruct((B, Sqp, h * d_v), jnp.bfloat16),
        scratch_shapes=[
            pltpu.VMEM((h, tq, 1), jnp.float32),     # running max
            pltpu.VMEM((h, tq, 1), jnp.float32),     # running denominator
            pltpu.VMEM((h, tq, d_v), jnp.float32),   # running output accumulator
        ],
        compiler_params=pltpu.CompilerParams(
            dimension_semantics=("parallel", "parallel", "arbitrary"),
            vmem_limit_bytes=_VMEM_LIMIT,
        ),
    )(*operands)

    return out[:, :Sq, :] if Sqp != Sq else out


# ---------------------------------------------------------------------------
# Parameter init (nn.Linear shapes; weights stored (in, out) in bf16, bias f32).
# Also builds the fused QKV weight once so the self-attention path reads x once.
# ---------------------------------------------------------------------------
def init_params(key, h, d_model, d_v=None):
    d_k = d_model // h
    d_v = d_v if d_v else d_k
    keys = jax.random.split(key, 8)

    def lin(kw, kb, fan_in, fan_out):
        bound = 1.0 / math.sqrt(fan_in)
        w = jax.random.uniform(kw, (fan_in, fan_out), jnp.float32, -bound, bound)
        b = jax.random.uniform(kb, (fan_out,), jnp.float32, -bound, bound)
        return w.astype(jnp.bfloat16), b.reshape(1, fan_out).astype(jnp.float32)

    wq, bq = lin(keys[0], keys[1], d_model, d_model)
    wk, bk = lin(keys[2], keys[3], d_model, d_model)
    wv, bv = lin(keys[4], keys[5], d_model, d_v * h)
    wo, bo = lin(keys[6], keys[7], d_v * h, d_model)

    params = {
        "q": (wq, bq), "k": (wk, bk), "v": (wv, bv), "out": (wo, bo),
        # fused projection for the self-attention fast path
        "qkv": (jnp.concatenate([wq, wk, wv], axis=1),
                jnp.concatenate([bq, bk, bv], axis=1)),
    }
    return params, d_k, d_v


# ---------------------------------------------------------------------------
# Forward pass mirroring MultiHeadedAttention.forward (returns final output only)
# ---------------------------------------------------------------------------
def multi_headed_attention(params, query, key, value, mask=None, *, h, d_k, d_v):
    B, Sq, d_model = query.shape
    Sk = key.shape[1]

    if (query is key) and (key is value):
        # Self-attention: one fused QKV matmul -> activation read from HBM once.
        qkv = pallas_linear(query.reshape(B * Sq, d_model), *params["qkv"],
                            out_dtype=jnp.bfloat16)
        q = qkv[:, :h * d_k].reshape(B, Sq, h * d_k)
        k = qkv[:, h * d_k:2 * h * d_k].reshape(B, Sk, h * d_k)
        v = qkv[:, 2 * h * d_k:].reshape(B, Sk, h * d_v)
    else:
        q = pallas_linear(query.reshape(B * Sq, d_model), *params["q"],
                          out_dtype=jnp.bfloat16).reshape(B, Sq, h * d_k)
        k = pallas_linear(key.reshape(B * Sk, d_model), *params["k"],
                          out_dtype=jnp.bfloat16).reshape(B, Sk, h * d_k)
        v = pallas_linear(value.reshape(B * Sk, d_model), *params["v"],
                          out_dtype=jnp.bfloat16).reshape(B, Sk, h * d_v)

    if mask is None:
        mask3 = None                      # no-mask kernel variant (no DMA, no select)
    elif mask.ndim == 2:                  # (B, Sk) padding mask
        mask3 = mask.reshape(B, 1, Sk).astype(jnp.int8)
    else:                                 # (B, Sq, Sk)
        mask3 = mask.astype(jnp.int8)

    x = pallas_attention(q, k, v, mask3, h=h, d_k=d_k, d_v=d_v)  # (B,Sq,h*d_v) bf16

    out = pallas_linear(x.reshape(B * Sq, h * d_v), *params["out"],
                        out_dtype=jnp.float32)
    return out.reshape(B, Sq, d_model)


# ---------------------------------------------------------------------------
# Pure-JAX reference mirroring the module semantics (bf16 MXU operands, f32 acc)
# ---------------------------------------------------------------------------
def reference_mha(params, query, key, value, mask, *, h, d_k, d_v):
    def lin(x, w, b, out_dtype):
        y = jnp.dot(x.astype(jnp.bfloat16), w.astype(jnp.bfloat16),
                    preferred_element_type=jnp.float32) + b
        return y.astype(out_dtype)

    B, Sq, d_model = query.shape
    Sk = key.shape[1]
    q = lin(query.reshape(B * Sq, d_model), *params["q"], jnp.bfloat16)
    q = q.reshape(B, Sq, h, d_k).transpose(0, 2, 1, 3)
    k = lin(key.reshape(B * Sk, d_model), *params["k"], jnp.bfloat16)
    k = k.reshape(B, Sk, h, d_k).transpose(0, 2, 1, 3)
    v = lin(value.reshape(B * Sk, d_model), *params["v"], jnp.bfloat16)
    v = v.reshape(B, Sk, h, d_v).transpose(0, 2, 1, 3)

    scores = jnp.einsum("bhqd,bhkd->bhqk", q, k,
                        preferred_element_type=jnp.float32) / math.sqrt(d_k)
    if mask is not None:
        m = mask[:, None, None, :] if mask.ndim == 2 else mask[:, None, :, :]
        scores = jnp.where(m == 0, -1000000000.0, scores)
    w = jax.nn.softmax(scores, axis=-1)
    x = jnp.einsum("bhqk,bhkd->bhqd", w.astype(jnp.bfloat16), v,
                   preferred_element_type=jnp.float32)
    x = x.transpose(0, 2, 1, 3).reshape(B * Sq, h * d_v).astype(jnp.bfloat16)
    return lin(x, *params["out"], jnp.float32).reshape(B, Sq, d_model)


if __name__ == "__main__":
    B, S, d_model, h = 2, 8, 32, 4

    root = jax.random.PRNGKey(0)
    k_params, k_x, k_mem = jax.random.split(root, 3)

    params, d_k, d_v = init_params(k_params, h, d_model)

    x = jax.random.normal(k_x, (B, S, d_model), jnp.float32)
    # 2-D padding mask (B, S): 1 = attend, 0 = masked (last two keys of batch 1 masked)
    mask = jnp.ones((B, S), jnp.int32).at[1, -2:].set(0)

    # 1) self-attention (fused QKV projection path) with a 2-D padding mask
    out = multi_headed_attention(params, x, x, x, mask, h=h, d_k=d_k, d_v=d_v)
    out = jax.block_until_ready(out)
    ref = reference_mha(params, x, x, x, mask, h=h, d_k=d_k, d_v=d_v)
    assert out.shape == (B, S, d_model)
    assert jnp.allclose(out, ref, atol=1e-2, rtol=1e-2), (
        f"self-attn mismatch: max abs diff = {jnp.max(jnp.abs(out - ref))}")

    # 2) cross-attention (separate projections), no user mask
    mem = jax.random.normal(k_mem, (B, S, d_model), jnp.float32)
    out2 = multi_headed_attention(params, x, mem, mem, None, h=h, d_k=d_k, d_v=d_v)
    out2 = jax.block_until_ready(out2)
    ref2 = reference_mha(params, x, mem, mem, None, h=h, d_k=d_k, d_v=d_v)
    assert jnp.allclose(out2, ref2, atol=1e-2, rtol=1e-2), (
        f"cross-attn mismatch: max abs diff = {jnp.max(jnp.abs(out2 - ref2))}")

    print("KERNEL_OK")
</pallas_src>

<mosaic_0001>
module attributes {stable_mosaic.version = 11 : i64} {
  func.func @_linear_kernel(%arg0: i32, %arg1: i32, %arg2: i32, %arg3: memref<16x128xf32, #tpu.memory_space<vmem>>, %arg4: memref<128x128xbf16, #tpu.memory_space<vmem>>, %arg5: memref<1x128xf32, #tpu.memory_space<vmem>>, %arg6: memref<16x128xbf16, #tpu.memory_space<vmem>>, %arg7: memref<16x128xf32, #tpu.memory_space<vmem>>) attributes {dimension_semantics = [#tpu.dimension_semantics<parallel>, #tpu.dimension_semantics<parallel>, #tpu.dimension_semantics<arbitrary>], iteration_bounds = array<i64: 1, 1, 1>, scalar_prefetch = 0 : i64, scratch_operands = 1 : i64, tpu.core_type = #tpu.core_type<tc>, window_params = [{transform_indices = @transform_0, window_bounds = array<i64: 16, 128>}, {transform_indices = @transform_1, window_bounds = array<i64: 128, 128>}, {transform_indices = @transform_2, window_bounds = array<i64: 1, 128>}, {transform_indices = @transform_3, window_bounds = array<i64: 16, 128>}]} {
    %c0_i32 = arith.constant 0 : i32
    %0 = arith.cmpi eq, %arg2, %c0_i32 : i32
    %1 = arith.extui %0 : i1 to i32
    %c0_i32_0 = arith.constant 0 : i32
    %2 = arith.cmpi ne, %1, %c0_i32_0 : i32
    scf.if %2 {
      %cst_10 = arith.constant 0.000000e+00 : f32
      %13 = vector.broadcast %cst_10 : f32 to vector<16x128xf32>
      %c0_11 = arith.constant 0 : index
      %c0_12 = arith.constant 0 : index
      %14 = vector.load %arg7[%c0_11, %c0_12] : memref<16x128xf32, #tpu.memory_space<vmem>>, vector<16x128xf32>
      tpu.vector_store %arg7[%c0_11, %c0_12], %13 {strides = array<i32>} : memref<16x128xf32, #tpu.memory_space<vmem>>, vector<16x128xf32>,
    } else {
    }
    %c0 = arith.constant 0 : index
    %c0_1 = arith.constant 0 : index
    %3 = vector.load %arg7[%c0, %c0_1] : memref<16x128xf32, #tpu.memory_space<vmem>>, vector<16x128xf32>
    %c0_2 = arith.constant 0 : index
    %c0_3 = arith.constant 0 : index
    %4 = vector.load %arg3[%c0_2, %c0_3] : memref<16x128xf32, #tpu.memory_space<vmem>>, vector<16x128xf32>
    %5 = arith.truncf %4 : vector<16x128xf32> to vector<16x128xbf16>
    %c0_4 = arith.constant 0 : index
    %c0_5 = arith.constant 0 : index
    %6 = vector.load %arg4[%c0_4, %c0_5] : memref<128x128xbf16, #tpu.memory_space<vmem>>, vector<128x128xbf16>
    %cst = arith.constant dense<0.000000e+00> : vector<16x128xf32>
    %7 = tpu.matmul %5, %6, %cst {dimension_numbers = #tpu.dot_dimension_numbers<[1], [0], [0], [1], [0, 0, 1, 1], [], []>} : vector<16x128xbf16>, vector<128x128xbf16>, vector<16x128xf32> -> vector<16x128xf32>
    %8 = arith.addf %3, %7 : vector<16x128xf32>
    %c0_6 = arith.constant 0 : index
    %c0_7 = arith.constant 0 : index
    %9 = vector.load %arg7[%c0_6, %c0_7] : memref<16x128xf32, #tpu.memory_space<vmem>>, vector<16x128xf32>
    tpu.vector_store %arg7[%c0_6, %c0_7], %8 {strides = array<i32>} : memref<16x128xf32, #tpu.memory_space<vmem>>, vector<16x128xf32>,
    %c0_i32_8 = arith.constant 0 : i32
    %10 = arith.cmpi eq, %arg2, %c0_i32_8 : i32
    %11 = arith.extui %10 : i1 to i32
    %c0_i32_9 = arith.constant 0 : i32
    %12 = arith.cmpi ne, %11, %c0_i32_9 : i32
    scf.if %12 {
      %c0_10 = arith.constant 0 : index
      %c0_11 = arith.constant 0 : index
      %13 = vector.load %arg7[%c0_10, %c0_11] : memref<16x128xf32, #tpu.memory_space<vmem>>, vector<16x128xf32>
      %c0_12 = arith.constant 0 : index
      %c0_13 = arith.constant 0 : index
      %14 = vector.load %arg5[%c0_12, %c0_13] : memref<1x128xf32, #tpu.memory_space<vmem>>, vector<1x128xf32>
      %15 = vector.broadcast %14 : vector<1x128xf32> to vector<16x128xf32>
      %16 = arith.addf %13, %15 : vector<16x128xf32>
      %17 = arith.truncf %16 : vector<16x128xf32> to vector<16x128xbf16>
      %c0_14 = arith.constant 0 : index
      %c0_15 = arith.constant 0 : index
      %18 = vector.load %arg6[%c0_14, %c0_15] : memref<16x128xbf16, #tpu.memory_space<vmem>>, vector<16x128xbf16>
      tpu.vector_store %arg6[%c0_14, %c0_15], %17 {strides = array<i32>} : memref<16x128xbf16, #tpu.memory_space<vmem>>, vector<16x128xbf16>,
    } else {
    }
    return
  }
  func.func @transform_0(%arg0: i32, %arg1: i32, %arg2: i32) -> (i32, i32) {
    %c0_i32 = arith.constant 0 : i32
    return %arg0, %arg2 : i32, i32
  }
  func.func @transform_1(%arg0: i32, %arg1: i32, %arg2: i32) -> (i32, i32) {
    %c0_i32 = arith.constant 0 : i32
    return %arg2, %arg1 : i32, i32
  }
  func.func @transform_2(%arg0: i32, %arg1: i32, %arg2: i32) -> (i32, i32) {
    %c0_i32 = arith.constant 0 : i32
    %c0_i32_0 = arith.constant 0 : i32
    return %c0_i32, %arg1 : i32, i32
  }
  func.func @transform_3(%arg0: i32, %arg1: i32, %arg2: i32) -> (i32, i32) {
    %c0_i32 = arith.constant 0 : i32
    return %arg0, %arg1 : i32, i32
  }
}

</mosaic_0001>

<llo_original>
// kernel: tpu_custom_call.1
$region0: #{tpu_custom_call.1}
  #allocation0 [shape = 'u32[]', space=smem, size = 0x4, offset = 0x4, fixed_abs, tag = 'smem constant byte address 0x4 - core index']
  #allocation1 [shape = 'u32[144,128]{1,0:T(1,128)}', space=vmem, size = 0x12000, scoped, tag = 'internal scratch']
  #allocation2 [shape = 'f32[16,128]{1,0:T(8,128)}', space=vmem, size = 0x2000, scoped, tag = 'scratch operand']
  %s0 = inlined_call_operand.hbm [shape: f32[16,128], index: 0, kind: input, shape index: {}]
  %s1 = inlined_call_operand.hbm [shape: bf16[128,128], index: 1, kind: input, shape index: {}]
  %s2 = inlined_call_operand.vmem [shape: f32[1,128], index: 2, kind: input, shape index: {}]
  %s3 = inlined_call_operand.hbm [shape: bf16[16,128], index: 3, kind: output, shape index: {}]
  %s4 = sld [smem:[#allocation0]]
  $region38: #{tpu_custom_call.1} parent=0
    _
  %s6 = ssub.s32 1, %s4
  %s7 = scalar_select 0, %s6, %s4
  $region1: #{tpu_custom_call.1} parent=0
    #allocation3 [shape = 'u8[8192]{0}', space=vmem, size = 0x2000, scoped, tag = 'input window, operand 0, single buffered']
    #allocation4 [shape = 's32[1]{0}', space=sflag, size = 0x4, scoped, tag = 'scoped memory for tpu_custom_call.1']
    #allocation5 [shape = 's32[1]{0}', space=sflag, size = 0x4, scoped, tag = 'scoped memory for tpu_custom_call.1']
    #allocation6 [shape = 'u8[32768]{0}', space=vmem, size = 0x8000, scoped, tag = 'input window, operand 1, single buffered']
    #allocation7 [shape = 's32[1]{0}', space=sflag, size = 0x4, scoped, tag = 'scoped memory for tpu_custom_call.1']
    #allocation8 [shape = 'u8[4096]{0}', space=vmem, size = 0x1000, scoped, tag = 'output window, operand 0, single buffered']
    %8 = vsyncpa [#allocation4], 0
    %9 = vsyncpa [#allocation7], 0
    %10 = vsyncpa [#allocation5], 0
    // Predicated region
    $region2: #{tpu_custom_call.1} parent=1 // pred_check
      _
    $region3: #{tpu_custom_call.1} parent=1 // pred_check_branch
      %12 = sbr.rel (0) target = $region5
    $region4: #{tpu_custom_call.1} parent=1 // pred_region
      %s14 = ssub.s32 256, 256
      %15 = vsyncadd [#allocation4], %s14
      %s16 = sshll.u32 [#allocation3], 4
      %s17 = int_to_ptr.vmem [resolvable:$true] %s16
      %22 = dma.hbm_to_vmem [thread:$0]  %s0, 256, %s17, [#allocation4], 128, 128, 8
    $region5: #{tpu_custom_call.1} parent=1 // pred_fallthru
      _
    // Predicated region
    $region6: #{tpu_custom_call.1} parent=1 // pred_check
      _
    $region7: #{tpu_custom_call.1} parent=1 // pred_check_branch
      %24 = sbr.rel (0) target = $region9
    $region8: #{tpu_custom_call.1} parent=1 // pred_region
      %s26 = ssub.s32 1024, 1024
      %27 = vsyncadd [#allocation7], %s26
      %s28 = sshll.u32 [#allocation6], 4
      %s29 = int_to_ptr.vmem [resolvable:$true] %s28
      %34 = dma.hbm_to_vmem [thread:$0]  %s1, 1024, %s29, [#allocation7], 64, 64, 4
    $region9: #{tpu_custom_call.1} parent=1 // pred_fallthru
      _
    // Predicated region
    $region10: #{tpu_custom_call.1} parent=1 // pred_check
      _
    $region11: #{tpu_custom_call.1} parent=1 // pred_check_branch
      %36 = sbr.rel (0) target = $region13
    $region12: #{tpu_custom_call.1} parent=1 // pred_region
      _
    $region13: #{tpu_custom_call.1} parent=1 // pred_fallthru
      _
    // Predicated region
    $region14: #{tpu_custom_call.1} parent=1 // pred_check
      _
    $region15: #{tpu_custom_call.1} parent=1 // pred_check_branch
      %38 = sbr.rel (0) target = $region17
    $region16: #{tpu_custom_call.1} parent=1 // pred_region
      %39 = dma.done [#allocation4], 256
    $region17: #{tpu_custom_call.1} parent=1 // pred_fallthru
      _
    // Predicated region
    $region18: #{tpu_custom_call.1} parent=1 // pred_check
      _
    $region19: #{tpu_custom_call.1} parent=1 // pred_check_branch
      %41 = sbr.rel (0) target = $region21
    $region20: #{tpu_custom_call.1} parent=1 // pred_region
      %42 = dma.done [#allocation7], 1024
    $region21: #{tpu_custom_call.1} parent=1 // pred_fallthru
      _
    %p44 = scmp.eq.s32.totalorder 0, 0
    // Predicated region
    $region22: #{tpu_custom_call.1} parent=1 // pred_check
      %p45 = pneg %p44
    $region23: #{tpu_custom_call.1} parent=1 // pred_check_branch
      %47 = sbr.rel (%p45) target = $region25
    $region24: #{tpu_custom_call.1} parent=1 // pred_region
      %48 = vst [vmem:[#allocation2] sm:$0xff] 0.0
      %49 = vst [vmem:[#allocation2 + $0x8] sm:$0xff] 0.0
    $region25: #{tpu_custom_call.1} parent=1 // pred_fallthru
      _
    %v50 = vld [vmem:[#allocation2] sm:$0xff]
    %v51 = vld [vmem:[#allocation2 + $0x8] sm:$0xff]
    %v52 = vld [vmem:[#allocation3] sm:$0xff]
    %v53 = vld [vmem:[#allocation3 + $0x8] sm:$0xff]
    %v54 = vpack.c.bf16 %v53, %v52
    %v55 = vld [vmem:[#allocation6] sm:$0xf]
    %v56 = vld [vmem:[#allocation6 + $0x4] sm:$0xf]
    %v57 = vld [vmem:[#allocation6 + $0x8] sm:$0xf]
    %v58 = vld [vmem:[#allocation6 + $0xc] sm:$0xf]
    %v59 = vld [vmem:[#allocation6 + $0x10] sm:$0xf]
    %v60 = vld [vmem:[#allocation6 + $0x14] sm:$0xf]
    %v61 = vld [vmem:[#allocation6 + $0x18] sm:$0xf]
    %v62 = vld [vmem:[#allocation6 + $0x1c] sm:$0xf]
    %v63 = vld [vmem:[#allocation6 + $0x20] sm:$0xf]
    %v64 = vld [vmem:[#allocation6 + $0x24] sm:$0xf]
    %v65 = vld [vmem:[#allocation6 + $0x28] sm:$0xf]
    %v66 = vld [vmem:[#allocation6 + $0x2c] sm:$0xf]
    %v67 = vld [vmem:[#allocation6 + $0x30] sm:$0xf]
    %v68 = vld [vmem:[#allocation6 + $0x34] sm:$0xf]
    %v69 = vld [vmem:[#allocation6 + $0x38] sm:$0xf]
    %v70 = vld [vmem:[#allocation6 + $0x3c] sm:$0xf]
    %v87 = vunpack.c.l.b16 %v55
    %v88 = vunpack.c.l.b16 %v56
    %v89 = vunpack.c.l.b16 %v57
    %v90 = vunpack.c.l.b16 %v58
    %v91 = vunpack.c.l.b16 %v59
    %v92 = vunpack.c.l.b16 %v60
    %v93 = vunpack.c.l.b16 %v61
    %v94 = vunpack.c.l.b16 %v62
    %v95 = vunpack.c.l.b16 %v63
    %v96 = vunpack.c.l.b16 %v64
    %v97 = vunpack.c.l.b16 %v65
    %v98 = vunpack.c.l.b16 %v66
    %v99 = vunpack.c.l.b16 %v67
    %v100 = vunpack.c.l.b16 %v68
    %v101 = vunpack.c.l.b16 %v69
    %v102 = vunpack.c.l.b16 %v70
    %v103 = vpack.c.b16 %v88, %v87
    %v104 = vpack.c.b16 %v90, %v89
    %v105 = vpack.c.b16 %v92, %v91
    %v106 = vpack.c.b16 %v94, %v93
    %v107 = vpack.c.b16 %v96, %v95
    %v108 = vpack.c.b16 %v98, %v97
    %v109 = vpack.c.b16 %v100, %v99
    %v110 = vpack.c.b16 %v102, %v101
    %119 = vmatprep.subr.bf16.mxu0 0
    %120 = vmatpush1.bf16.msra.mxu0 %v103
    %121 = vmatprep.subr.bf16.mxu0 0
    %122 = vmatpush1.bf16.msra.mxu0 %v104
    %123 = vmatprep.subr.bf16.mxu0 0
    %124 = vmatpush1.bf16.msra.mxu0 %v105
    %125 = vmatprep.subr.bf16.mxu0 0
    %126 = vmatpush1.bf16.msra.mxu0 %v106
    %127 = vmatprep.subr.bf16.mxu0 0
    %128 = vmatpush1.bf16.msra.mxu0 %v107
    %129 = vmatprep.subr.bf16.mxu0 0
    %130 = vmatpush1.bf16.msra.mxu0 %v108
    %131 = vmatprep.subr.bf16.mxu0 0
    %132 = vmatpush1.bf16.msra.mxu0 %v109
    %133 = vmatprep.subr.bf16.mxu0 0
    %134 = vmatpush1.bf16.msra.mxu0 %v110
    %135 = vmatprep.subr.bf16.mxu0 0
    %136 = vmatpush1.bf16.msra.mxu0 0
    %137 = vmatprep.subr.bf16.mxu0 0
    %138 = vmatpush1.bf16.msra.mxu0 0
    %139 = vmatprep.subr.bf16.mxu0 0
    %140 = vmatpush1.bf16.msra.mxu0 0
    %141 = vmatprep.subr.bf16.mxu0 0
    %142 = vmatpush1.bf16.msra.mxu0 0
    %143 = vmatprep.subr.bf16.mxu0 0
    %144 = vmatpush1.bf16.msra.mxu0 0
    %145 = vmatprep.subr.bf16.mxu0 0
    %146 = vmatpush1.bf16.msra.mxu0 0
    %147 = vmatprep.subr.bf16.mxu0 0
    %148 = vmatpush1.bf16.msra.mxu0 0
    %149 = vmatprep.subr.bf16.mxu0 0
    %150 = vmatpush1.bf16.msra.mxu0 0
    %151 = vmatprep.mubr.bf16.mxu0 0
    %152 = vmatmul.mubr.bf16.gmra.mrb[0].mxu0 %v54
    %v153 = vpop.f32.mrb[0].mxu0
    %v154 = vadd.f32 0.0, %v153
    %v155 = vpop.f32.mrb[0].mxu0
    %v156 = vpop.f32.mrb[0].mxu0
    %v157 = vadd.f32 0.0, %v156
    %v158 = vpop.f32.mrb[0].mxu0
    %159 = vdwg.mxu0
    %v160 = vadd.f32 %v50, %v154
    %v161 = vadd.f32 %v51, %v157
    %162 = vst [vmem:[#allocation2] sm:$0xff] %v160
    %163 = vst [vmem:[#allocation2 + $0x8] sm:$0xff] %v161
    // Predicated region
    $region26: #{tpu_custom_call.1} parent=1 // pred_check
      %p164 = pneg %p44
    $region27: #{tpu_custom_call.1} parent=1 // pred_check_branch
      %166 = sbr.rel (%p164) target = $region29
    $region28: #{tpu_custom_call.1} parent=1 // pred_region
      %v167 = vld [vmem:[#allocation2] sm:$0xff]
      %v168 = vld [vmem:[#allocation2 + $0x8] sm:$0xff]
      %v169 = vld [vmem:[%s2] sm:$0x1]
      %v171 = vlaneseq
      %v172 = vshrl.u32 %v171, 7
      %v173 = vsub.s32 0, %v172
      %v174 = vrot.slane %v169, %v173
      %v176 = vadd.f32 %v167, %v174
      %v177 = vadd.f32 %v168, %v174
      %v178 = vpack.c.bf16 %v177, %v176
      %v180 = vunpack.c.l.b16 %v178
      %v181 = vunpack.c.h.b16 %v178
      %v182 = vpack.c.b16 %v180, %v180
      %v183 = vpack.c.b16 %v181, %v181
      %186 = vst [vmem:[#allocation8] sm:$0xf] %v182
      %187 = vst [vmem:[#allocation8 + $0x4] sm:$0xf] %v183
    $region29: #{tpu_custom_call.1} parent=1 // pred_fallthru
      _
    // Predicated region
    $region30: #{tpu_custom_call.1} parent=1 // pred_check
      _
    $region31: #{tpu_custom_call.1} parent=1 // pred_check_branch
      %189 = sbr.rel (0) target = $region33
    $region32: #{tpu_custom_call.1} parent=1 // pred_region
      %s191 = ssub.s32 128, 128
      %192 = vsyncadd [#allocation5], %s191
      %s193 = sshll.u32 [#allocation8], 4
      %s194 = int_to_ptr.vmem [resolvable:$true] %s193
      %199 = dma.vmem_to_hbm [thread:$0]  %s194, 128, %s3, [#allocation5], 64, 64, 4
    $region33: #{tpu_custom_call.1} parent=1 // pred_fallthru
      _
    // Predicated region
    $region34: #{tpu_custom_call.1} parent=1 // pred_check
      _
    $region35: #{tpu_custom_call.1} parent=1 // pred_check_branch
      %201 = sbr.rel (0) target = $region37
    $region36: #{tpu_custom_call.1} parent=1 // pred_region
      %202 = dma.done [#allocation5], 128
    $region37: #{tpu_custom_call.1} parent=1 // pred_fallthru
      _
    %203 = vsyncpa [#allocation4], 1
    %204 = vsyncpa [#allocation7], 1
    %205 = vsyncpa [#allocation5], 1

</llo_original>
